<compile_context>
chip_gen: v6e
topology: v6e:2x2x1
jax: 0.10.0
libtpu: 0.0.40
codegen_flags: <defaults>
</compile_context>

<pallas_src>
import functools

import jax
import jax.numpy as jnp
from jax import lax
from jax.experimental import pallas as pl
from jax.experimental.pallas import tpu as pltpu

_LANES = 128
_BLOCK_BYTES = 4 * 1024 * 1024    # ~4 MiB of the wider input dtype per input per grid step
_CHUNK_GROUPS = 8                 # groups per inner fori_loop step (vreg-resident partials)
_VMEM_LIMIT = 48 * 1024 * 1024    # > v5e 16 MiB default, < v7x 64 MiB physical


def _detect_num_tensorcores():
    """Best-effort TensorCore count (2 on v7x, 1 on v5e/v6e). Defaults to 1."""
    try:
        info = pltpu.get_tpu_info()
    except Exception:
        return 1
    for name in ("num_cores", "core_count", "num_tensorcores", "tensorcore_count"):
        v = getattr(info, name, None)
        if isinstance(v, int) and v >= 1:
            return min(v, 2)
    return 1


def _dice_partials_kernel(p_ref, t_ref, o_ref, *, sub, block_groups, chunk,
                          n_groups, steps_per_core, has_core_axis,
                          ragged_possible):
    if has_core_axis:
        c = pl.program_id(0)            # CORE_PARALLEL axis (one value per TC)
        i = pl.program_id(1)            # sequential reduction axis
        block_id = c * steps_per_core + i
    else:
        i = pl.program_id(0)
        block_id = i

    @pl.when(i == 0)
    def _init():
        o_ref[...] = jnp.zeros((2, sub, _LANES), jnp.float32)

    # Static inner-loop structure.
    full_chunks = block_groups // chunk
    tail = block_groups - full_chunks * chunk
    if full_chunks <= 8:
        unroll = max(1, full_chunks)
    elif full_chunks % 4 == 0:
        unroll = 4
    elif full_chunks % 2 == 0:
        unroll = 2
    else:
        unroll = 1

    def accumulate(masked):
        def chunk_partials(base, cnt):
            xp = p_ref[pl.ds(base, cnt)].astype(jnp.float32)   # (cnt, sub, 128)
            xt = t_ref[pl.ds(base, cnt)].astype(jnp.float32)
            # sigmoid(x) = 0.5*(tanh(x/2)+1): single EUP op (vs exp + recip).
            p = 0.5 * (jnp.tanh(0.5 * xp) + 1.0)
            t = xt
            if masked:
                # Valid groups in this logical block (<=0 for clamped dup blocks).
                valid = n_groups - block_id * block_groups
                g = base + lax.broadcasted_iota(jnp.int32, (cnt, sub, _LANES), 0)
                ok = g < valid
                # Select (not multiply): drops OOB garbage/NaN cleanly.
                p = jnp.where(ok, p, 0.0)
                t = jnp.where(ok, t, 0.0)
            # Leading-axis reduce: pure VPU adds into (sub, 128) partials.
            return jnp.sum(p * t, axis=0), jnp.sum(p + t, axis=0)

        zero = jnp.zeros((sub, _LANES), jnp.float32)

        def body(j, carry):
            ci, cu = carry
            di, du = chunk_partials(pl.multiple_of(j * chunk, chunk), chunk)
            return ci + di, cu + du

        if full_chunks > 0:
            acc_i, acc_u = lax.fori_loop(0, full_chunks, body, (zero, zero),
                                         unroll=unroll)
        else:
            acc_i, acc_u = zero, zero
        if tail:
            di, du = chunk_partials(full_chunks * chunk, tail)
            acc_i = acc_i + di
            acc_u = acc_u + du

        # One VMEM read-modify-write of the resident output block per grid step.
        o_ref[0] += acc_i
        o_ref[1] += acc_u

    if ragged_possible:
        is_full = (block_id + 1) * block_groups <= n_groups

        @pl.when(is_full)
        def _full_block():
            accumulate(masked=False)

        @pl.when(jnp.logical_not(is_full))
        def _ragged_block():
            accumulate(masked=True)
    else:
        accumulate(masked=False)


def dice_loss(predicted, target, smooth=1.0, *, num_cores=None,
              core_parallel=True):
    """Dice loss over arbitrarily-shaped tensors (e.g. NCHW logits / masks)."""
    assert predicted.shape == target.shape
    n = int(predicted.size)
    if n == 0:
        return jnp.zeros((), jnp.float32)   # (2*0+s)/(0+s) == 1 -> loss 0

    # Native sublane packing: (g, 8, 128) for 32-bit inputs, (g, 16, 128)
    # when a 16-bit (bf16/fp16) input is present.
    itemsizes = (predicted.dtype.itemsize, target.dtype.itemsize)
    sub = 16 if min(itemsizes) <= 2 else 8
    group = sub * _LANES

    p_flat = predicted.reshape(-1)
    t_flat = target.reshape(-1)

    n_groups = pl.cdiv(n, group)
    pad = n_groups * group - n
    if pad:
        # Rare fallback copy (see TODO at top); sigmoid(0)=0.5 pad contribution
        # to sum(p) is removed exactly below.
        p_flat = jnp.pad(p_flat, (0, pad))
        t_flat = jnp.pad(t_flat, (0, pad))

    p3 = p_flat.reshape(n_groups, sub, _LANES)
    t3 = t_flat.reshape(n_groups, sub, _LANES)

    # ~4 MiB (of the wider dtype) per input per grid step.
    bytes_per_group = sub * _LANES * max(itemsizes)
    block_groups = max(1, min(n_groups, _BLOCK_BYTES // bytes_per_group))
    n_blocks = pl.cdiv(n_groups, block_groups)
    chunk = max(1, min(_CHUNK_GROUPS, block_groups))

    if num_cores is None:
        num_cores = _detect_num_tensorcores()
    num_cores = max(1, min(int(num_cores), n_blocks))

    if num_cores > 1:
        steps = pl.cdiv(n_blocks, num_cores)
        grid = (num_cores, steps)

        def in_map(c, i):
            # Clamp so duplicated / ragged steps still DMA an in-bounds block;
            # their contribution is masked out inside the kernel.
            return (jnp.minimum(c * steps + i, n_blocks - 1), 0, 0)

        out_map = lambda c, i: (c, 0, 0, 0)
        covered = num_cores * steps * block_groups
        lead = pltpu.CORE_PARALLEL if core_parallel else pltpu.ARBITRARY
        semantics = (lead, pltpu.ARBITRARY)
    else:
        steps = n_blocks
        grid = (n_blocks,)
        in_map = lambda i: (i, 0, 0)
        out_map = lambda i: (0, 0, 0, 0)
        covered = n_blocks * block_groups
        semantics = (pltpu.ARBITRARY,)

    kernel = functools.partial(
        _dice_partials_kernel,
        sub=sub, block_groups=block_groups, chunk=chunk,
        n_groups=n_groups, steps_per_core=steps,
        has_core_axis=(num_cores > 1),
        ragged_possible=(covered != n_groups))

    # NOTE: if xprof shows exposed DMA at step start on v7x, add
    # pipeline_mode=pl.Buffered(3) to the two input specs (cheap experiment).
    partials = pl.pallas_call(
        kernel,
        out_shape=jax.ShapeDtypeStruct((num_cores, 2, sub, _LANES), jnp.float32),
        grid_spec=pltpu.PrefetchScalarGridSpec(
            num_scalar_prefetch=0,
            grid=grid,
            in_specs=[
                pl.BlockSpec((block_groups, sub, _LANES), in_map),
                pl.BlockSpec((block_groups, sub, _LANES), in_map),
            ],
            out_specs=pl.BlockSpec((None, 2, sub, _LANES), out_map),
        ),
        compiler_params=pltpu.CompilerParams(
            dimension_semantics=semantics,
            vmem_limit_bytes=_VMEM_LIMIT),
    )(p3, t3)

    # Final cross-lane/core reduction + scalar math in plain JAX.
    sums = jnp.sum(partials, axis=(0, 2, 3))     # (2,) = [sum(p*t), sum(p)+sum(t)]
    intersection = sums[0]
    union0 = sums[1]
    if pad:
        union0 = union0 - 0.5 * pad              # zero pads only add sigmoid(0)=0.5 to sum(p)
    union = union0 + smooth
    return 1.0 - (2.0 * intersection + smooth) / union


def dice_loss_ref(predicted, target, smooth=1.0):
    p = jax.nn.sigmoid(predicted.astype(jnp.float32))
    t = target.astype(jnp.float32)
    intersection = jnp.sum(p * t)
    union = jnp.sum(p) + jnp.sum(t) + smooth
    return 1.0 - (2.0 * intersection + smooth) / union


if __name__ == "__main__":
    key = jax.random.PRNGKey(0)
    k1, k2, k3, k4 = jax.random.split(key, 4)

    def check(pred, tgt, name, tol, **kw):
        loss = dice_loss(pred, tgt, smooth=1.0, **kw)
        jax.block_until_ready(loss)
        ref = dice_loss_ref(pred, tgt, smooth=1.0)
        assert jnp.allclose(loss, ref, atol=tol, rtol=tol), (name, loss, ref)

    # 1) NCHW logits / masks like the UNet training script.
    pred = jax.random.normal(k1, (2, 4, 16, 16), dtype=jnp.float32)
    tgt = (jax.random.uniform(k2, (2, 4, 16, 16)) > 0.5).astype(jnp.float32)
    check(pred, tgt, "nchw_small", 1e-5)

    # 2) Size not divisible by 1024: exercises the pad fallback + correction.
    p2 = jax.random.normal(k3, (3, 5, 7, 11), dtype=jnp.float32)
    t2 = (jax.random.uniform(k4, (3, 5, 7, 11)) > 0.5).astype(jnp.float32)
    check(p2, t2, "ragged_pad", 1e-5)

    # 3) Multi-block tensor with a group-ragged last block (1251 groups over
    #    1024-group blocks): exercises the pl.when-gated masked path.
    p3_in = jax.random.normal(k1, (3, 2, 417, 512), dtype=jnp.float32)
    t3_in = (jax.random.uniform(k2, (3, 2, 417, 512)) > 0.5).astype(jnp.float32)
    check(p3_in, t3_in, "multi_block_ragged", 1e-4)

    # 4) Two-row grid path (layout used for the 2-TensorCore split on v7x),
    #    run with portable "arbitrary" semantics so it also runs on 1-TC chips.
    check(p3_in, t3_in, "two_core_layout", 1e-4, num_cores=2, core_parallel=False)

    # 5) bf16 inputs: native (16,128) grouping, half the HBM bytes.
    p5 = jax.random.normal(k3, (4, 2, 64, 64), dtype=jnp.bfloat16)
    t5 = (jax.random.uniform(k4, (4, 2, 64, 64)) > 0.5).astype(jnp.bfloat16)
    check(p5, t5, "bf16", 1e-4)

    print("KERNEL_OK")
</pallas_src>

<mosaic_0001>
module attributes {stable_mosaic.version = 11 : i64} {
  func.func @_dice_partials_kernel(%arg0: i32, %arg1: memref<2x8x128xf32, #tpu.memory_space<vmem>>, %arg2: memref<2x8x128xf32, #tpu.memory_space<vmem>>, %arg3: memref<1x2x8x128xf32, #tpu.memory_space<vmem>>) attributes {dimension_semantics = [#tpu.dimension_semantics<arbitrary>], iteration_bounds = array<i64: 1>, scalar_prefetch = 0 : i64, scratch_operands = 0 : i64, tpu.core_type = #tpu.core_type<tc>, window_params = [{transform_indices = @transform_0, window_bounds = array<i64: 2, 8, 128>}, {transform_indices = @transform_1, window_bounds = array<i64: 2, 8, 128>}, {pipeline_mode = #tpu.pipeline_mode<synchronous>, transform_indices = @transform_2, window_bounds = array<i64: 1, 2, 8, 128>}]} {
    %c0_i32 = arith.constant 0 : i32
    %0 = arith.cmpi eq, %arg0, %c0_i32 : i32
    %1 = arith.extui %0 : i1 to i32
    %c0_i32_0 = arith.constant 0 : i32
    %2 = arith.cmpi ne, %1, %c0_i32_0 : i32
    scf.if %2 {
      %cst_25 = arith.constant 0.000000e+00 : f32
      %35 = vector.broadcast %cst_25 : f32 to vector<2x8x128xf32>
      %c0_26 = arith.constant 0 : index
      %c0_27 = arith.constant 0 : index
      %c0_28 = arith.constant 0 : index
      %c0_29 = arith.constant 0 : index
      %36 = vector.load %arg3[%c0_26, %c0_27, %c0_28, %c0_29] : memref<1x2x8x128xf32, #tpu.memory_space<vmem>>, vector<1x2x8x128xf32>
      %37 = vector.shape_cast %36 : vector<1x2x8x128xf32> to vector<2x8x128xf32>
      %38 = vector.shape_cast %35 : vector<2x8x128xf32> to vector<1x2x8x128xf32>
      tpu.vector_store %arg3[%c0_26, %c0_27, %c0_28, %c0_29], %38 {strides = array<i32>} : memref<1x2x8x128xf32, #tpu.memory_space<vmem>>, vector<1x2x8x128xf32>,
    } else {
    }
    %cst = arith.constant 0.000000e+00 : f32
    %3 = vector.broadcast %cst : f32 to vector<8x128xf32>
    %c0_i32_1 = arith.constant 0 : i32
    %c2_i32 = arith.constant 2 : i32
    %4 = arith.muli %c0_i32_1, %c2_i32 : i32
    %5 = tpu.assume_multiple %4, 2 : i32
    %6 = arith.index_cast %5 : i32 to index
    %c0 = arith.constant 0 : index
    %c0_2 = arith.constant 0 : index
    %7 = vector.load %arg1[%6, %c0, %c0_2] : memref<2x8x128xf32, #tpu.memory_space<vmem>>, vector<2x8x128xf32>
    %8 = arith.index_cast %5 : i32 to index
    %c0_3 = arith.constant 0 : index
    %c0_4 = arith.constant 0 : index
    %9 = vector.load %arg2[%8, %c0_3, %c0_4] : memref<2x8x128xf32, #tpu.memory_space<vmem>>, vector<2x8x128xf32>
    %cst_5 = arith.constant 5.000000e-01 : f32
    %10 = vector.broadcast %cst_5 : f32 to vector<2x8x128xf32>
    %11 = arith.mulf %10, %7 : vector<2x8x128xf32>
    %12 = math.tanh %11 : vector<2x8x128xf32>
    %cst_6 = arith.constant 1.000000e+00 : f32
    %13 = vector.broadcast %cst_6 : f32 to vector<2x8x128xf32>
    %14 = arith.addf %12, %13 : vector<2x8x128xf32>
    %cst_7 = arith.constant 5.000000e-01 : f32
    %15 = vector.broadcast %cst_7 : f32 to vector<2x8x128xf32>
    %16 = arith.mulf %15, %14 : vector<2x8x128xf32>
    %17 = arith.mulf %16, %9 : vector<2x8x128xf32>
    %cst_8 = arith.constant dense<0.000000e+00> : vector<8x128xf32>
    %18 = vector.multi_reduction <add>, %17, %cst_8 [0] : vector<2x8x128xf32> to vector<8x128xf32>
    %19 = arith.addf %16, %9 : vector<2x8x128xf32>
    %cst_9 = arith.constant dense<0.000000e+00> : vector<8x128xf32>
    %20 = vector.multi_reduction <add>, %19, %cst_9 [0] : vector<2x8x128xf32> to vector<8x128xf32>
    %21 = arith.addf %3, %18 : vector<8x128xf32>
    %22 = arith.addf %3, %20 : vector<8x128xf32>
    %c1_i32 = arith.constant 1 : i32
    %c0_10 = arith.constant 0 : index
    %c0_11 = arith.constant 0 : index
    %c0_12 = arith.constant 0 : index
    %c0_13 = arith.constant 0 : index
    %23 = vector.load %arg3[%c0_10, %c0_11, %c0_12, %c0_13] : memref<1x2x8x128xf32, #tpu.memory_space<vmem>>, vector<1x1x8x128xf32>
    %24 = vector.shape_cast %23 : vector<1x1x8x128xf32> to vector<8x128xf32>
    %25 = arith.addf %24, %21 : vector<8x128xf32>
    %c0_14 = arith.constant 0 : index
    %c0_15 = arith.constant 0 : index
    %c0_16 = arith.constant 0 : index
    %c0_17 = arith.constant 0 : index
    %26 = vector.load %arg3[%c0_14, %c0_15, %c0_16, %c0_17] : memref<1x2x8x128xf32, #tpu.memory_space<vmem>>, vector<1x1x8x128xf32>
    %27 = vector.shape_cast %26 : vector<1x1x8x128xf32> to vector<8x128xf32>
    %28 = vector.shape_cast %25 : vector<8x128xf32> to vector<1x1x8x128xf32>
    tpu.vector_store %arg3[%c0_14, %c0_15, %c0_16, %c0_17], %28 {strides = array<i32>} : memref<1x2x8x128xf32, #tpu.memory_space<vmem>>, vector<1x1x8x128xf32>,
    %c0_18 = arith.constant 0 : index
    %c1 = arith.constant 1 : index
    %c0_19 = arith.constant 0 : index
    %c0_20 = arith.constant 0 : index
    %29 = vector.load %arg3[%c0_18, %c1, %c0_19, %c0_20] : memref<1x2x8x128xf32, #tpu.memory_space<vmem>>, vector<1x1x8x128xf32>
    %30 = vector.shape_cast %29 : vector<1x1x8x128xf32> to vector<8x128xf32>
    %31 = arith.addf %30, %22 : vector<8x128xf32>
    %c0_21 = arith.constant 0 : index
    %c1_22 = arith.constant 1 : index
    %c0_23 = arith.constant 0 : index
    %c0_24 = arith.constant 0 : index
    %32 = vector.load %arg3[%c0_21, %c1_22, %c0_23, %c0_24] : memref<1x2x8x128xf32, #tpu.memory_space<vmem>>, vector<1x1x8x128xf32>
    %33 = vector.shape_cast %32 : vector<1x1x8x128xf32> to vector<8x128xf32>
    %34 = vector.shape_cast %31 : vector<8x128xf32> to vector<1x1x8x128xf32>
    tpu.vector_store %arg3[%c0_21, %c1_22, %c0_23, %c0_24], %34 {strides = array<i32>} : memref<1x2x8x128xf32, #tpu.memory_space<vmem>>, vector<1x1x8x128xf32>,
    return
  }
  func.func @transform_0(%arg0: i32) -> (i32, i32, i32) {
    %c0_i32 = arith.constant 0 : i32
    %c0_i32_0 = arith.constant 0 : i32
    %c0_i32_1 = arith.constant 0 : i32
    return %arg0, %c0_i32, %c0_i32_0 : i32, i32, i32
  }
  func.func @transform_1(%arg0: i32) -> (i32, i32, i32) {
    %c0_i32 = arith.constant 0 : i32
    %c0_i32_0 = arith.constant 0 : i32
    %c0_i32_1 = arith.constant 0 : i32
    return %arg0, %c0_i32, %c0_i32_0 : i32, i32, i32
  }
  func.func @transform_2(%arg0: i32) -> (i32, i32, i32, i32) {
    %c0_i32 = arith.constant 0 : i32
    %c0_i32_0 = arith.constant 0 : i32
    %c0_i32_1 = arith.constant 0 : i32
    %c0_i32_2 = arith.constant 0 : i32
    %c0_i32_3 = arith.constant 0 : i32
    return %c0_i32, %c0_i32_0, %c0_i32_1, %c0_i32_2 : i32, i32, i32, i32
  }
}

</mosaic_0001>

<llo_original>
// kernel: tpu_custom_call.1
$region0: #{tpu_custom_call.1}
  #allocation0 [shape = 'u32[]', space=smem, size = 0x4, offset = 0x4, fixed_abs, tag = 'smem constant byte address 0x4 - core index']
  #allocation1 [shape = 'u32[144,128]{1,0:T(1,128)}', space=vmem, size = 0x12000, scoped, tag = 'internal scratch']
  %s0 = inlined_call_operand.hbm [shape: f32[2,8,128], index: 0, kind: input, shape index: {}]
  %s1 = inlined_call_operand.hbm [shape: f32[2,8,128], index: 1, kind: input, shape index: {}]
  %s2 = inlined_call_operand.hbm [shape: f32[1,2,8,128], index: 2, kind: output, shape index: {}]
  %s3 = sld [smem:[#allocation0]]
  $region30: #{tpu_custom_call.1} parent=0
    _
  %s5 = ssub.s32 1, %s3
  %s6 = scalar_select 0, %s5, %s3
  $region1: #{tpu_custom_call.1} parent=0
    #allocation2 [shape = 'u8[8192]{0}', space=vmem, size = 0x2000, scoped, tag = 'input window, operand 0, single buffered']
    #allocation3 [shape = 's32[1]{0}', space=sflag, size = 0x4, scoped, tag = 'scoped memory for tpu_custom_call.1']
    #allocation4 [shape = 's32[1]{0}', space=sflag, size = 0x4, scoped, tag = 'scoped memory for tpu_custom_call.1']
    #allocation5 [shape = 'u8[8192]{0}', space=vmem, size = 0x2000, scoped, tag = 'input window, operand 1, single buffered']
    #allocation6 [shape = 's32[1]{0}', space=sflag, size = 0x4, scoped, tag = 'scoped memory for tpu_custom_call.1']
    #allocation7 [shape = 'u8[8192]{0}', space=vmem, size = 0x2000, scoped, tag = 'output window, operand 0, single buffered']
    %7 = vsyncpa [#allocation3], 0
    %8 = vsyncpa [#allocation6], 0
    %9 = vsyncpa [#allocation4], 0
    // Predicated region
    $region2: #{tpu_custom_call.1} parent=1 // pred_check
      _
    $region3: #{tpu_custom_call.1} parent=1 // pred_check_branch
      %11 = sbr.rel (0) target = $region5
    $region4: #{tpu_custom_call.1} parent=1 // pred_region
      %s13 = ssub.s32 256, 256
      %14 = vsyncadd [#allocation3], %s13
      %s15 = sshll.u32 [#allocation2], 4
      %s16 = int_to_ptr.vmem [resolvable:$true] %s15
      %21 = dma.hbm_to_vmem [thread:$0]  %s0, 256, %s16, [#allocation3], 128, 128, 8
    $region5: #{tpu_custom_call.1} parent=1 // pred_fallthru
      _
    // Predicated region
    $region6: #{tpu_custom_call.1} parent=1 // pred_check
      _
    $region7: #{tpu_custom_call.1} parent=1 // pred_check_branch
      %23 = sbr.rel (0) target = $region9
    $region8: #{tpu_custom_call.1} parent=1 // pred_region
      %s25 = ssub.s32 256, 256
      %26 = vsyncadd [#allocation6], %s25
      %s27 = sshll.u32 [#allocation5], 4
      %s28 = int_to_ptr.vmem [resolvable:$true] %s27
      %33 = dma.hbm_to_vmem [thread:$0]  %s1, 256, %s28, [#allocation6], 128, 128, 8
    $region9: #{tpu_custom_call.1} parent=1 // pred_fallthru
      _
    // Predicated region
    $region10: #{tpu_custom_call.1} parent=1 // pred_check
      _
    $region11: #{tpu_custom_call.1} parent=1 // pred_check_branch
      %35 = sbr.rel (0) target = $region13
    $region12: #{tpu_custom_call.1} parent=1 // pred_region
      %36 = dma.done [#allocation3], 256
    $region13: #{tpu_custom_call.1} parent=1 // pred_fallthru
      _
    // Predicated region
    $region14: #{tpu_custom_call.1} parent=1 // pred_check
      _
    $region15: #{tpu_custom_call.1} parent=1 // pred_check_branch
      %38 = sbr.rel (0) target = $region17
    $region16: #{tpu_custom_call.1} parent=1 // pred_region
      %39 = dma.done [#allocation6], 256
    $region17: #{tpu_custom_call.1} parent=1 // pred_fallthru
      _
    %p40 = scmp.eq.s32.totalorder 0, 0
    // Predicated region
    $region18: #{tpu_custom_call.1} parent=1 // pred_check
      %p41 = pneg %p40
    $region19: #{tpu_custom_call.1} parent=1 // pred_check_branch
      %43 = sbr.rel (%p41) target = $region21
    $region20: #{tpu_custom_call.1} parent=1 // pred_region
      %44 = vst [vmem:[#allocation7] sm:$0xff] 0.0
      %45 = vst [vmem:[#allocation7 + $0x8] sm:$0xff] 0.0
    $region21: #{tpu_custom_call.1} parent=1 // pred_fallthru
      _
    %s46 = smul.u32 0, 8
    %s47 = scalar_lea.vmem [#allocation2], %s46
    %v48 = vld [vmem:[%s47] sm:$0xff]
    %v49 = vld [vmem:[%s47 + $0x8] sm:$0xff]
    %s50 = scalar_lea.vmem [#allocation5], %s46
    %v51 = vld [vmem:[%s50] sm:$0xff]
    %v52 = vld [vmem:[%s50 + $0x8] sm:$0xff]
    %v53 = vmul.f32 %v48, 0.5
    %v54 = vmul.f32 %v49, 0.5
    %v55 = vtanh.pop %v53
    %v56 = vtanh.pop %v54
    %v57 = vadd.f32 %v55, 1.0
    %v58 = vadd.f32 %v56, 1.0
    %v59 = vmul.f32 %v57, 0.5
    %v60 = vmul.f32 %v58, 0.5
    %v61 = vmul.f32 %v59, %v51
    %v62 = vmul.f32 %v60, %v52
    %v63 = vadd.f32 %v61, %v62
    %v64 = vadd.f32 %v59, %v51
    %v65 = vadd.f32 %v60, %v52
    %v66 = vadd.f32 %v64, %v65
    %v67 = vadd.f32 %v63, 0.0
    %v68 = vadd.f32 %v66, 0.0
    %v69 = vld [vmem:[#allocation7] sm:$0xff]
    %v70 = vadd.f32 %v69, %v67
    %71 = vst [vmem:[#allocation7] sm:$0xff] %v70
    %s72 = scalar_lea.vmem [#allocation7], 8
    %v73 = vld [vmem:[%s72] sm:$0xff]
    %v74 = vadd.f32 %v73, %v68
    %75 = vst [vmem:[%s72] sm:$0xff] %v74
    // Predicated region
    $region22: #{tpu_custom_call.1} parent=1 // pred_check
      _
    $region23: #{tpu_custom_call.1} parent=1 // pred_check_branch
      %77 = sbr.rel (0) target = $region25
    $region24: #{tpu_custom_call.1} parent=1 // pred_region
      %s79 = ssub.s32 256, 256
      %80 = vsyncadd [#allocation4], %s79
      %s81 = sshll.u32 [#allocation7], 4
      %s82 = int_to_ptr.vmem [resolvable:$true] %s81
      %87 = dma.vmem_to_hbm [thread:$0]  %s82, 256, %s2, [#allocation4], 128, 128, 8
    $region25: #{tpu_custom_call.1} parent=1 // pred_fallthru
      _
    // Predicated region
    $region26: #{tpu_custom_call.1} parent=1 // pred_check
      _
    $region27: #{tpu_custom_call.1} parent=1 // pred_check_branch
      %89 = sbr.rel (0) target = $region29
    $region28: #{tpu_custom_call.1} parent=1 // pred_region
      %90 = dma.done [#allocation4], 256
    $region29: #{tpu_custom_call.1} parent=1 // pred_fallthru
      _
    %91 = vsyncpa [#allocation3], 1
    %92 = vsyncpa [#allocation6], 1
    %93 = vsyncpa [#allocation4], 1

</llo_original>
